<compile_context>
chip_gen: v5e
topology: v5e:2x2
jax: 0.10.0
libtpu: 0.0.40
codegen_flags: <defaults>
</compile_context>

<pallas_src>
import jax
import jax.numpy as jnp
from jax.experimental import pallas as pl
from jax.experimental.pallas import tpu as pltpu


def _cdiv(a, b):
    return (a + b - 1) // b


def _round_up(a, m):
    return _cdiv(a, m) * m


def _choose_tiles(B, D, elem_bytes):
    """Pick (Bt, Dk) so one x tile is ~1-4 MiB and padded buffers stay small."""
    target = 2 << 20          # ~2 MiB of x per grid step (DMA sweet spot)
    max_tile = 4 << 20
    min_rows, max_rows = 512, 8192

    # Contraction tile: keep the whole feature dim in one step unless even a
    # min_rows tile would exceed the budget (then tile D in 128-lane multiples).
    if D * elem_bytes * min_rows <= max_tile:
        Dk = D
    else:
        Dk = _round_up(max_tile // (elem_bytes * min_rows), 128)
    nk = _cdiv(D, Dk)

    rows = max(min_rows, target // max(1, Dk * elem_bytes))
    rows = min(_round_up(rows, 128), max_rows)
    if B <= rows:
        if B >= 256:
            # keep >= 2 batch tiles so the "parallel" axis can use both v7x cores
            rows = _round_up(_cdiv(B, 2), 128)
        else:
            rows = _round_up(B, 8)
    nb = _cdiv(B, rows)
    return rows, Dk, nb, nk


def _vmem_bytes(Bt, Dk, K, elem_bytes, weight_buffers):
    """Conservative lane/sublane-padded VMEM footprint of this kernel."""
    def pad(n, m):
        return _round_up(max(int(n), 1), m)
    x_tiles = 2 * pad(Bt, 16) * pad(Dk, 128) * elem_bytes             # double-buffered stream
    w_tiles = weight_buffers * pad(Dk, 16) * pad(K + 2, 128) * elem_bytes
    out_tiles = 2 * pad(Bt, 8) * 128 * 4                              # (Bt,1) f32 lane-pads to 128
    acc = pad(Bt, 8) * pad(K + 2, 128) * 4
    ss = pad(Bt, 8) * 128 * 4
    return x_tiles + w_tiles + out_tiles + acc + ss


def _vmem_limit_bytes(need):
    try:
        cap = int(pltpu.get_tpu_info().vmem_capacity_bytes)
    except Exception:
        cap = 64 << 20            # conservative (v7x-sized) fallback
    # ~15% headroom for compiler scratch; never request less than 2x our estimate.
    return int(min(int(0.85 * cap), max(2 * need, 16 << 20)))


def factorization_machine(x, v, w, b, *, compute_dtype=jnp.bfloat16):
    """FactorizationMachine forward.

    x: (B, D); v: (D, K); w: (D, 1) (transposed nn.Linear weight); b: (1,).
    Returns (B, 1) float32.
    """
    B, D = x.shape
    K = v.shape[1]
    elem_bytes = jnp.dtype(compute_dtype).itemsize

    Bt, Dk, nb, nk = _choose_tiles(B, D, elem_bytes)
    d_pad = nk * Dk

    # Merged resident RHS [v | w | s], s = 0.5 * sum_j v_j^2: collapses
    # 0.5 * sum_j (x^2)@(v^2) to a single matvec.  Built in f32, cast once.
    v32 = v.astype(jnp.float32)
    s = 0.5 * jnp.sum(v32 * v32, axis=1, keepdims=True)                 # (D, 1)
    vws = jnp.concatenate([v32, w.astype(jnp.float32), s], axis=1)      # (D, K+2)
    if d_pad != D:
        # Zero-pad the (small) weights along D so every weight block is fully
        # valid; x itself is never padded (no extra HBM pass over the big tensor).
        vws = jnp.pad(vws, ((0, d_pad - D), (0, 0)))
    vws = vws.astype(compute_dtype)

    # bf16 streaming of x halves HBM traffic for the dominant tensor.  In the
    # full model x should be produced/stored in bf16 upstream so this cast is
    # fused there rather than being a separate pass.
    x = x.astype(compute_dtype)
    b = b.astype(jnp.float32)

    def kernel(b_ref, x_ref, vw_ref, o_ref, acc_ref, ss_ref):
        kk = pl.program_id(1)

        @pl.when(kk == 0)
        def _init():
            acc_ref[...] = jnp.zeros_like(acc_ref)
            ss_ref[...] = jnp.zeros_like(ss_ref)

        xt = x_ref[...]                                             # (Bt, Dk)
        if d_pad != D:
            # Last feature tile of x is a partial block: zero its garbage
            # columns so (garbage * 0-weight) can never produce NaN/Inf.
            col = kk * Dk + jax.lax.broadcasted_iota(jnp.int32, xt.shape, 1)
            xt = jnp.where(col < D, xt, jnp.zeros_like(xt))

        vw = vw_ref[...]                                            # (Dk, K+2)

        # One fused MXU push: [x@v | x@w | (ignored x@s)] with f32 accumulation.
        acc_ref[...] += jnp.dot(xt, vw, preferred_element_type=jnp.float32)

        # 0.5 * sum_j (x^2)@(v^2)  ==  (x^2) @ s   (s lives in column K+1 of vws).
        xf = xt.astype(jnp.float32)         # square in f32 (v5e has no bf16 VALU)
        x2 = (xf * xf).astype(vw.dtype)
        ss_ref[...] += jnp.dot(x2, vw[:, K + 1:K + 2],
                               preferred_element_type=jnp.float32)

        @pl.when(kk == pl.num_programs(1) - 1)
        def _finalize():
            a = acc_ref[...]
            xv = a[:, :K]                                           # full-D x@v
            lin = a[:, K:K + 1]                                     # full-D x@w
            sq = 0.5 * jnp.sum(xv * xv, axis=1, keepdims=True)      # 0.5*sum (x@v)^2
            o_ref[...] = (lin + b_ref[0] + sq + ss_ref[...]).astype(o_ref.dtype)

    def build(weight_buffers):
        vw_kwargs = {}
        if weight_buffers is not None:
            vw_kwargs["pipeline_mode"] = pl.Buffered(weight_buffers)
        need = _vmem_bytes(Bt, Dk, K, elem_bytes,
                           weight_buffers if weight_buffers else 2)
        return pl.pallas_call(
            kernel,
            out_shape=jax.ShapeDtypeStruct((B, 1), jnp.float32),
            grid=(nb, nk),
            in_specs=[
                pl.BlockSpec(memory_space=pltpu.MemorySpace.SMEM),       # bias scalar
                pl.BlockSpec((Bt, Dk), lambda i, k: (i, k)),             # x: streamed
                pl.BlockSpec((Dk, K + 2), lambda i, k: (k, 0),           # [v|w|s]
                             **vw_kwargs),
            ],
            out_specs=pl.BlockSpec((Bt, 1), lambda i, k: (i, 0)),
            scratch_shapes=[
                pltpu.VMEM((Bt, K + 2), jnp.float32),   # accum of [x@v | x@w | junk]
                pltpu.VMEM((Bt, 1), jnp.float32),       # accum of (x^2)@s
            ],
            compiler_params=pltpu.CompilerParams(
                dimension_semantics=("parallel", "arbitrary"),
                vmem_limit_bytes=_vmem_limit_bytes(need),
            ),
        )

    if nk == 1:
        # Weight block is grid-constant -> one VMEM buffer is enough.
        try:
            return build(1)(b, x, vws)
        except Exception:
            pass  # pipeline_mode unsupported on this JAX version -> default buffering
    return build(None)(b, x, vws)


def reference(x, v, w, b):
    # Mirrors the PyTorch module verbatim (it ADDS sum_of_square).
    linear = x @ w + b
    square_of_sum = (x @ v) ** 2
    sum_of_square = (x ** 2) @ (v ** 2)
    return linear + 0.5 * jnp.sum(square_of_sum + sum_of_square, axis=1, keepdims=True)


if __name__ == "__main__":
    # NOTE: at these demo shapes everything fits in single (8,128)/(16,128) tiles;
    # the byte-sized batch tiling, D-tiling and bf16 streaming pay off at
    # production batch / input_dim sizes.
    B, INPUT_DIM, LATENT_DIM = 8, 32, 16

    key = jax.random.PRNGKey(0)
    kx, kv, kw = jax.random.split(key, 3)

    x = jax.random.normal(kx, (B, INPUT_DIM), dtype=jnp.float32)
    # v ~ torch.rand(input_dim, latent_dim) -> uniform [0, 1)
    v = jax.random.uniform(kv, (INPUT_DIM, LATENT_DIM), dtype=jnp.float32)
    # nn.Linear(input_dim, 1): xavier_normal_ weight, zero bias.
    std = (2.0 / (INPUT_DIM + 1)) ** 0.5
    w = jax.random.normal(kw, (INPUT_DIM, 1), dtype=jnp.float32) * std
    b = jnp.zeros((1,), dtype=jnp.float32)

    out = factorization_machine(x, v, w, b)
    jax.block_until_ready(out)

    ref = reference(x, v, w, b)
    assert out.shape == (B, 1)
    # bf16 streaming of x / weights -> looser tolerance vs the f32 reference.
    assert jnp.allclose(out, ref, rtol=2e-2, atol=2e-1), (
        f"max abs err = {float(jnp.max(jnp.abs(out - ref)))}")

    print("KERNEL_OK")
</pallas_src>

<mosaic_0001>
module attributes {stable_mosaic.version = 11 : i64} {
  func.func @kernel(%arg0: i32, %arg1: i32, %arg2: memref<1xf32, #tpu.memory_space<smem>>, %arg3: memref<8x32xbf16, #tpu.memory_space<vmem>>, %arg4: memref<32x18xbf16, #tpu.memory_space<vmem>>, %arg5: memref<8x1xf32, #tpu.memory_space<vmem>>, %arg6: memref<8x18xf32, #tpu.memory_space<vmem>>, %arg7: memref<8x1xf32, #tpu.memory_space<vmem>>) attributes {dimension_semantics = [#tpu.dimension_semantics<parallel>, #tpu.dimension_semantics<arbitrary>], iteration_bounds = array<i64: 1, 1>, scalar_prefetch = 0 : i64, scratch_operands = 2 : i64, tpu.core_type = #tpu.core_type<tc>, window_params = [{transform_indices = @transform_0, window_bounds = array<i64: 1>}, {transform_indices = @transform_1, window_bounds = array<i64: 8, 32>}, {pipeline_mode = #tpu.pipeline_mode<synchronous>, transform_indices = @transform_2, window_bounds = array<i64: 32, 18>}, {transform_indices = @transform_3, window_bounds = array<i64: 8, 1>}]} {
    %c0_i32 = arith.constant 0 : i32
    %0 = arith.cmpi eq, %arg1, %c0_i32 : i32
    %1 = arith.extui %0 : i1 to i32
    %c0_i32_0 = arith.constant 0 : i32
    %2 = arith.cmpi ne, %1, %c0_i32_0 : i32
    scf.if %2 {
      %cst_15 = arith.constant 0.000000e+00 : f32
      %20 = vector.broadcast %cst_15 : f32 to vector<8x18xf32>
      %c0_16 = arith.constant 0 : index
      %c0_17 = arith.constant 0 : index
      %21 = vector.load %arg6[%c0_16, %c0_17] : memref<8x18xf32, #tpu.memory_space<vmem>>, vector<8x18xf32>
      tpu.vector_store %arg6[%c0_16, %c0_17], %20 {strides = array<i32>} : memref<8x18xf32, #tpu.memory_space<vmem>>, vector<8x18xf32>,
      %cst_18 = arith.constant 0.000000e+00 : f32
      %22 = vector.broadcast %cst_18 : f32 to vector<8x1xf32>
      %c0_19 = arith.constant 0 : index
      %c0_20 = arith.constant 0 : index
      %23 = vector.load %arg7[%c0_19, %c0_20] : memref<8x1xf32, #tpu.memory_space<vmem>>, vector<8x1xf32>
      tpu.vector_store %arg7[%c0_19, %c0_20], %22 {strides = array<i32>} : memref<8x1xf32, #tpu.memory_space<vmem>>, vector<8x1xf32>,
    } else {
    }
    %c0 = arith.constant 0 : index
    %c0_1 = arith.constant 0 : index
    %3 = vector.load %arg3[%c0, %c0_1] : memref<8x32xbf16, #tpu.memory_space<vmem>>, vector<8x32xbf16>
    %c0_2 = arith.constant 0 : index
    %c0_3 = arith.constant 0 : index
    %4 = vector.load %arg4[%c0_2, %c0_3] : memref<32x18xbf16, #tpu.memory_space<vmem>>, vector<32x18xbf16>
    %c0_4 = arith.constant 0 : index
    %c0_5 = arith.constant 0 : index
    %5 = vector.load %arg6[%c0_4, %c0_5] : memref<8x18xf32, #tpu.memory_space<vmem>>, vector<8x18xf32>
    %cst = arith.constant dense<0.000000e+00> : vector<8x18xf32>
    %6 = tpu.matmul %3, %4, %cst {dimension_numbers = #tpu.dot_dimension_numbers<[1], [0], [0], [1], [0, 0, 1, 1], [], []>} : vector<8x32xbf16>, vector<32x18xbf16>, vector<8x18xf32> -> vector<8x18xf32>
    %7 = arith.addf %5, %6 : vector<8x18xf32>
    %c0_6 = arith.constant 0 : index
    %c0_7 = arith.constant 0 : index
    %8 = vector.load %arg6[%c0_6, %c0_7] : memref<8x18xf32, #tpu.memory_space<vmem>>, vector<8x18xf32>
    tpu.vector_store %arg6[%c0_6, %c0_7], %7 {strides = array<i32>} : memref<8x18xf32, #tpu.memory_space<vmem>>, vector<8x18xf32>,
    %9 = arith.extf %3 : vector<8x32xbf16> to vector<8x32xf32>
    %10 = arith.mulf %9, %9 : vector<8x32xf32>
    %11 = arith.truncf %10 : vector<8x32xf32> to vector<8x32xbf16>
    %c0_8 = arith.constant 0 : index
    %c0_9 = arith.constant 0 : index
    %12 = vector.load %arg7[%c0_8, %c0_9] : memref<8x1xf32, #tpu.memory_space<vmem>>, vector<8x1xf32>
    %13 = vector.extract_strided_slice %4 {offsets = [0, 17], sizes = [32, 1], strides = [1, 1]} : vector<32x18xbf16> to vector<32x1xbf16>
    %cst_10 = arith.constant dense<0.000000e+00> : vector<8x1xf32>
    %14 = tpu.matmul %11, %13, %cst_10 {dimension_numbers = #tpu.dot_dimension_numbers<[1], [0], [0], [1], [0, 0, 1, 1], [], []>} : vector<8x32xbf16>, vector<32x1xbf16>, vector<8x1xf32> -> vector<8x1xf32>
    %15 = arith.addf %12, %14 : vector<8x1xf32>
    %c0_11 = arith.constant 0 : index
    %c0_12 = arith.constant 0 : index
    %16 = vector.load %arg7[%c0_11, %c0_12] : memref<8x1xf32, #tpu.memory_space<vmem>>, vector<8x1xf32>
    tpu.vector_store %arg7[%c0_11, %c0_12], %15 {strides = array<i32>} : memref<8x1xf32, #tpu.memory_space<vmem>>, vector<8x1xf32>,
    %c0_i32_13 = arith.constant 0 : i32
    %17 = arith.cmpi eq, %arg1, %c0_i32_13 : i32
    %18 = arith.extui %17 : i1 to i32
    %c0_i32_14 = arith.constant 0 : i32
    %19 = arith.cmpi ne, %18, %c0_i32_14 : i32
    scf.if %19 {
      %c0_15 = arith.constant 0 : index
      %c0_16 = arith.constant 0 : index
      %20 = vector.load %arg6[%c0_15, %c0_16] : memref<8x18xf32, #tpu.memory_space<vmem>>, vector<8x18xf32>
      %21 = vector.extract_strided_slice %20 {offsets = [0, 0], sizes = [8, 16], strides = [1, 1]} : vector<8x18xf32> to vector<8x16xf32>
      %22 = vector.extract_strided_slice %20 {offsets = [0, 16], sizes = [8, 1], strides = [1, 1]} : vector<8x18xf32> to vector<8x1xf32>
      %23 = arith.mulf %21, %21 : vector<8x16xf32>
      %cst_17 = arith.constant dense<0.000000e+00> : vector<8xf32>
      %24 = vector.multi_reduction <add>, %23, %cst_17 [1] : vector<8x16xf32> to vector<8xf32>
      %25 = vector.shape_cast %24 : vector<8xf32> to vector<8x1xf32>
      %cst_18 = arith.constant 5.000000e-01 : f32
      %26 = vector.broadcast %cst_18 : f32 to vector<8x1xf32>
      %27 = arith.mulf %26, %25 : vector<8x1xf32>
      %c0_19 = arith.constant 0 : index
      %28 = memref.load %arg2[%c0_19] : memref<1xf32, #tpu.memory_space<smem>>
      %29 = vector.broadcast %28 : f32 to vector<8x1xf32>
      %30 = arith.addf %22, %29 : vector<8x1xf32>
      %31 = arith.addf %30, %27 : vector<8x1xf32>
      %c0_20 = arith.constant 0 : index
      %c0_21 = arith.constant 0 : index
      %32 = vector.load %arg7[%c0_20, %c0_21] : memref<8x1xf32, #tpu.memory_space<vmem>>, vector<8x1xf32>
      %33 = arith.addf %31, %32 : vector<8x1xf32>
      %c0_22 = arith.constant 0 : index
      %c0_23 = arith.constant 0 : index
      %34 = vector.load %arg5[%c0_22, %c0_23] : memref<8x1xf32, #tpu.memory_space<vmem>>, vector<8x1xf32>
      tpu.vector_store %arg5[%c0_22, %c0_23], %33 {strides = array<i32>} : memref<8x1xf32, #tpu.memory_space<vmem>>, vector<8x1xf32>,
    } else {
    }
    return
  }
  func.func @transform_0(%arg0: i32, %arg1: i32) -> i32 {
    %c0_i32 = arith.constant 0 : i32
    %c0_i32_0 = arith.constant 0 : i32
    return %c0_i32 : i32
  }
  func.func @transform_1(%arg0: i32, %arg1: i32) -> (i32, i32) {
    %c0_i32 = arith.constant 0 : i32
    return %arg0, %arg1 : i32, i32
  }
  func.func @transform_2(%arg0: i32, %arg1: i32) -> (i32, i32) {
    %c0_i32 = arith.constant 0 : i32
    %c0_i32_0 = arith.constant 0 : i32
    return %arg1, %c0_i32 : i32, i32
  }
  func.func @transform_3(%arg0: i32, %arg1: i32) -> (i32, i32) {
    %c0_i32 = arith.constant 0 : i32
    %c0_i32_0 = arith.constant 0 : i32
    return %arg0, %c0_i32 : i32, i32
  }
}

module attributes {stable_mosaic.version = 11 : i64} {
  func.func @kernel(%arg0: i32, %arg1: i32, %arg2: memref<1xf32, #tpu.memory_space<smem>>, %arg3: memref<8x32xbf16, #tpu.memory_space<vmem>>, %arg4: memref<32x18xbf16, #tpu.memory_space<vmem>>, %arg5: memref<8x1xf32, #tpu.memory_space<vmem>>, %arg6: memref<8x18xf32, #tpu.memory_space<vmem>>, %arg7: memref<8x1xf32, #tpu.memory_space<vmem>>) attributes {dimension_semantics = [#tpu.dimension_semantics<parallel>, #tpu.dimension_semantics<arbitrary>], iteration_bounds = array<i64: 1, 1>, scalar_prefetch = 0 : i64, scratch_operands = 2 : i64, tpu.core_type = #tpu.core_type<tc>, window_params = [{transform_indices = @transform_0, window_bounds = array<i64: 1>}, {transform_indices = @transform_1, window_bounds = array<i64: 8, 32>}, {transform_indices = @transform_2, window_bounds = array<i64: 32, 18>}, {transform_indices = @transform_3, window_bounds = array<i64: 8, 1>}]} {
    %c0_i32 = arith.constant 0 : i32
    %0 = arith.cmpi eq, %arg1, %c0_i32 : i32
    %1 = arith.extui %0 : i1 to i32
    %c0_i32_0 = arith.constant 0 : i32
    %2 = arith.cmpi ne, %1, %c0_i32_0 : i32
    scf.if %2 {
      %cst_15 = arith.constant 0.000000e+00 : f32
      %20 = vector.broadcast %cst_15 : f32 to vector<8x18xf32>
      %c0_16 = arith.constant 0 : index
      %c0_17 = arith.constant 0 : index
      %21 = vector.load %arg6[%c0_16, %c0_17] : memref<8x18xf32, #tpu.memory_space<vmem>>, vector<8x18xf32>
      tpu.vector_store %arg6[%c0_16, %c0_17], %20 {strides = array<i32>} : memref<8x18xf32, #tpu.memory_space<vmem>>, vector<8x18xf32>,
      %cst_18 = arith.constant 0.000000e+00 : f32
      %22 = vector.broadcast %cst_18 : f32 to vector<8x1xf32>
      %c0_19 = arith.constant 0 : index
      %c0_20 = arith.constant 0 : index
      %23 = vector.load %arg7[%c0_19, %c0_20] : memref<8x1xf32, #tpu.memory_space<vmem>>, vector<8x1xf32>
      tpu.vector_store %arg7[%c0_19, %c0_20], %22 {strides = array<i32>} : memref<8x1xf32, #tpu.memory_space<vmem>>, vector<8x1xf32>,
    } else {
    }
    %c0 = arith.constant 0 : index
    %c0_1 = arith.constant 0 : index
    %3 = vector.load %arg3[%c0, %c0_1] : memref<8x32xbf16, #tpu.memory_space<vmem>>, vector<8x32xbf16>
    %c0_2 = arith.constant 0 : index
    %c0_3 = arith.constant 0 : index
    %4 = vector.load %arg4[%c0_2, %c0_3] : memref<32x18xbf16, #tpu.memory_space<vmem>>, vector<32x18xbf16>
    %c0_4 = arith.constant 0 : index
    %c0_5 = arith.constant 0 : index
    %5 = vector.load %arg6[%c0_4, %c0_5] : memref<8x18xf32, #tpu.memory_space<vmem>>, vector<8x18xf32>
    %cst = arith.constant dense<0.000000e+00> : vector<8x18xf32>
    %6 = tpu.matmul %3, %4, %cst {dimension_numbers = #tpu.dot_dimension_numbers<[1], [0], [0], [1], [0, 0, 1, 1], [], []>} : vector<8x32xbf16>, vector<32x18xbf16>, vector<8x18xf32> -> vector<8x18xf32>
    %7 = arith.addf %5, %6 : vector<8x18xf32>
    %c0_6 = arith.constant 0 : index
    %c0_7 = arith.constant 0 : index
    %8 = vector.load %arg6[%c0_6, %c0_7] : memref<8x18xf32, #tpu.memory_space<vmem>>, vector<8x18xf32>
    tpu.vector_store %arg6[%c0_6, %c0_7], %7 {strides = array<i32>} : memref<8x18xf32, #tpu.memory_space<vmem>>, vector<8x18xf32>,
    %9 = arith.extf %3 : vector<8x32xbf16> to vector<8x32xf32>
    %10 = arith.mulf %9, %9 : vector<8x32xf32>
    %11 = arith.truncf %10 : vector<8x32xf32> to vector<8x32xbf16>
    %c0_8 = arith.constant 0 : index
    %c0_9 = arith.constant 0 : index
    %12 = vector.load %arg7[%c0_8, %c0_9] : memref<8x1xf32, #tpu.memory_space<vmem>>, vector<8x1xf32>
    %13 = vector.extract_strided_slice %4 {offsets = [0, 17], sizes = [32, 1], strides = [1, 1]} : vector<32x18xbf16> to vector<32x1xbf16>
    %cst_10 = arith.constant dense<0.000000e+00> : vector<8x1xf32>
    %14 = tpu.matmul %11, %13, %cst_10 {dimension_numbers = #tpu.dot_dimension_numbers<[1], [0], [0], [1], [0, 0, 1, 1], [], []>} : vector<8x32xbf16>, vector<32x1xbf16>, vector<8x1xf32> -> vector<8x1xf32>
    %15 = arith.addf %12, %14 : vector<8x1xf32>
    %c0_11 = arith.constant 0 : index
    %c0_12 = arith.constant 0 : index
    %16 = vector.load %arg7[%c0_11, %c0_12] : memref<8x1xf32, #tpu.memory_space<vmem>>, vector<8x1xf32>
    tpu.vector_store %arg7[%c0_11, %c0_12], %15 {strides = array<i32>} : memref<8x1xf32, #tpu.memory_space<vmem>>, vector<8x1xf32>,
    %c0_i32_13 = arith.constant 0 : i32
    %17 = arith.cmpi eq, %arg1, %c0_i32_13 : i32
    %18 = arith.extui %17 : i1 to i32
    %c0_i32_14 = arith.constant 0 : i32
    %19 = arith.cmpi ne, %18, %c0_i32_14 : i32
    scf.if %19 {
      %c0_15 = arith.constant 0 : index
      %c0_16 = arith.constant 0 : index
      %20 = vector.load %arg6[%c0_15, %c0_16] : memref<8x18xf32, #tpu.memory_space<vmem>>, vector<8x18xf32>
      %21 = vector.extract_strided_slice %20 {offsets = [0, 0], sizes = [8, 16], strides = [1, 1]} : vector<8x18xf32> to vector<8x16xf32>
      %22 = vector.extract_strided_slice %20 {offsets = [0, 16], sizes = [8, 1], strides = [1, 1]} : vector<8x18xf32> to vector<8x1xf32>
      %23 = arith.mulf %21, %21 : vector<8x16xf32>
      %cst_17 = arith.constant dense<0.000000e+00> : vector<8xf32>
      %24 = vector.multi_reduction <add>, %23, %cst_17 [1] : vector<8x16xf32> to vector<8xf32>
      %25 = vector.shape_cast %24 : vector<8xf32> to vector<8x1xf32>
      %cst_18 = arith.constant 5.000000e-01 : f32
      %26 = vector.broadcast %cst_18 : f32 to vector<8x1xf32>
      %27 = arith.mulf %26, %25 : vector<8x1xf32>
      %c0_19 = arith.constant 0 : index
      %28 = memref.load %arg2[%c0_19] : memref<1xf32, #tpu.memory_space<smem>>
      %29 = vector.broadcast %28 : f32 to vector<8x1xf32>
      %30 = arith.addf %22, %29 : vector<8x1xf32>
      %31 = arith.addf %30, %27 : vector<8x1xf32>
      %c0_20 = arith.constant 0 : index
      %c0_21 = arith.constant 0 : index
      %32 = vector.load %arg7[%c0_20, %c0_21] : memref<8x1xf32, #tpu.memory_space<vmem>>, vector<8x1xf32>
      %33 = arith.addf %31, %32 : vector<8x1xf32>
      %c0_22 = arith.constant 0 : index
      %c0_23 = arith.constant 0 : index
      %34 = vector.load %arg5[%c0_22, %c0_23] : memref<8x1xf32, #tpu.memory_space<vmem>>, vector<8x1xf32>
      tpu.vector_store %arg5[%c0_22, %c0_23], %33 {strides = array<i32>} : memref<8x1xf32, #tpu.memory_space<vmem>>, vector<8x1xf32>,
    } else {
    }
    return
  }
  func.func @transform_0(%arg0: i32, %arg1: i32) -> i32 {
    %c0_i32 = arith.constant 0 : i32
    %c0_i32_0 = arith.constant 0 : i32
    return %c0_i32 : i32
  }
  func.func @transform_1(%arg0: i32, %arg1: i32) -> (i32, i32) {
    %c0_i32 = arith.constant 0 : i32
    return %arg0, %arg1 : i32, i32
  }
  func.func @transform_2(%arg0: i32, %arg1: i32) -> (i32, i32) {
    %c0_i32 = arith.constant 0 : i32
    %c0_i32_0 = arith.constant 0 : i32
    return %arg1, %c0_i32 : i32, i32
  }
  func.func @transform_3(%arg0: i32, %arg1: i32) -> (i32, i32) {
    %c0_i32 = arith.constant 0 : i32
    %c0_i32_0 = arith.constant 0 : i32
    return %arg0, %c0_i32 : i32, i32
  }
}

</mosaic_0001>

<llo_original>
// kernel: tpu_custom_call.1
$region0: #{tpu_custom_call.1}
  #allocation0 [shape = 'u32[]', space=smem, size = 0x4, offset = 0x4, fixed_abs, tag = 'smem constant byte address 0x4 - core index']
  #allocation1 [shape = 'u32[72,128]{1,0:T(1,128)}', space=vmem, size = 0x9000, scoped, tag = 'internal scratch']
  #allocation2 [shape = 'f32[8,18]{1,0:T(8,128)}', space=vmem, size = 0x1000, scoped, tag = 'scratch operand']
  #allocation3 [shape = 'f32[8,1]{1,0:T(8,128)}', space=vmem, size = 0x1000, scoped, tag = 'scratch operand']
  #allocation4 [shape = 'f32[1]{0:T(128)S(6)}', space=smem, size = 0x200, scoped, tag = 'scoped memory for tpu_custom_call.1']
  %s0 = inlined_call_operand.<no memory space> [shape: f32[1], index: 0, kind: input, shape index: {}]
  %s1 = inlined_call_operand.vmem [shape: bf16[8,32], index: 1, kind: input, shape index: {}]
  %s2 = inlined_call_operand.vmem [shape: bf16[32,18], index: 2, kind: input, shape index: {}]
  %s3 = inlined_call_operand.vmem [shape: f32[8,1], index: 3, kind: output, shape index: {}]
  %s4 = sld [smem:[#allocation0]]
  $region30: #{tpu_custom_call.1} parent=0
    _
  %s6 = ssub.s32 1, %s4
  %s7 = scalar_select 0, %s6, %s4
  %8 = sst [smem:[#allocation4]] %s0
  // Predicated region
  $region2: #{tpu_custom_call.1} parent=0 // pred_check
    _
  $region3: #{tpu_custom_call.1} parent=0 // pred_check_branch
    %10 = sbr.rel (0) target = $region5
  $region4: #{tpu_custom_call.1} parent=0 // pred_region
    _
  $region5: #{tpu_custom_call.1} parent=0 // pred_fallthru
    _
  // Predicated region
  $region6: #{tpu_custom_call.1} parent=0 // pred_check
    _
  $region7: #{tpu_custom_call.1} parent=0 // pred_check_branch
    %12 = sbr.rel (0) target = $region9
  $region8: #{tpu_custom_call.1} parent=0 // pred_region
    _
  $region9: #{tpu_custom_call.1} parent=0 // pred_fallthru
    _
  // Predicated region
  $region10: #{tpu_custom_call.1} parent=0 // pred_check
    _
  $region11: #{tpu_custom_call.1} parent=0 // pred_check_branch
    %14 = sbr.rel (0) target = $region13
  $region12: #{tpu_custom_call.1} parent=0 // pred_region
    _
  $region13: #{tpu_custom_call.1} parent=0 // pred_fallthru
    _
  %p16 = scmp.eq.s32.totalorder 0, 0
  // Predicated region
  $region14: #{tpu_custom_call.1} parent=0 // pred_check
    %p17 = pneg %p16
  $region15: #{tpu_custom_call.1} parent=0 // pred_check_branch
    %19 = sbr.rel (%p17) target = $region17
  $region16: #{tpu_custom_call.1} parent=0 // pred_region
    %vm20 = vcmask 146432
    %21 = vst.msk [vmem:[#allocation2] sm:$0xff] %vm20, 0.0
    %vm22 = vcmask 7168
    %23 = vst.msk [vmem:[#allocation3] sm:$0xff] %vm22, 0.0
  $region17: #{tpu_custom_call.1} parent=0 // pred_fallthru
    _
  %v24 = vld [vmem:[%s1] sm:$0xf]
  %v25 = vld [vmem:[%s2] sm:$0xf]
  %v26 = vld [vmem:[%s2 + $0x4] sm:$0xf]
  %v27 = vld [vmem:[%s2 + $0x8] sm:$0xf]
  %v28 = vld [vmem:[%s2 + $0xc] sm:$0xf]
  %v29 = vld [vmem:[#allocation2] sm:$0xff]
  %v34 = vunpack.c.l.b16 %v25
  %v35 = vunpack.c.l.b16 %v26
  %v36 = vunpack.c.l.b16 %v27
  %v37 = vunpack.c.l.b16 %v28
  %v38 = vpack.c.b16 %v35, %v34
  %v39 = vpack.c.b16 %v37, %v36
  %vm42 = vcmask 261120
  %v44 = vsel %vm42, %v24, 0
  %46 = vmatpush.bf16.msra.mxu0 0
  %47 = vmatpush.bf16.msra.mxu0 0
  %48 = vmatpush.bf16.msra.mxu0 0
  %49 = vmatpush.bf16.msra.mxu0 0
  %50 = vmatpush.bf16.msra.mxu0 0
  %51 = vmatpush.bf16.msra.mxu0 0
  %52 = vmatpush.bf16.msra.mxu0 %v39
  %53 = vmatpush.bf16.msra.mxu0 %v38
  %54 = vmatmul.bf16.gmra.mxu0 %v44
  %v55 = vpop.f32.mrf.mxu0
  %v56 = vadd.f32 0.0, %v55
  %v57 = vpop.f32.mrf.mxu0
  %58 = vdwg.mxu0
  %v59 = vadd.f32 %v29, %v56
  %vm60 = vcmask 146432
  %61 = vst.msk [vmem:[#allocation2] sm:$0xff] %vm60, %v59
  %v62 = vunpack.c.l.bf16 %v24
  %v63 = vmul.f32 %v62, %v62
  %v64 = vpack.c.bf16 %v63, %v63
  %v65 = vld [vmem:[#allocation3] sm:$0xff]
  %66 = vrot.lane.b32.xlu0 %v38, 111
  %v67 = vpop.permute.xlu0 %66
  %68 = vrot.lane.b32.xlu0 %v39, 111
  %v69 = vpop.permute.xlu0 %68
  %v73 = vsel %vm42, %v64, 0
  %75 = vmatpush.bf16.msra.mxu0 0
  %76 = vmatpush.bf16.msra.mxu0 0
  %77 = vmatpush.bf16.msra.mxu0 0
  %78 = vmatpush.bf16.msra.mxu0 0
  %79 = vmatpush.bf16.msra.mxu0 0
  %80 = vmatpush.bf16.msra.mxu0 0
  %81 = vmatpush.bf16.msra.mxu0 %v69
  %82 = vmatpush.bf16.msra.mxu0 %v67
  %83 = vmatmul.bf16.gmra.mxu0 %v73
  %v84 = vpop.f32.mrf.mxu0
  %v85 = vadd.f32 0.0, %v84
  %v86 = vpop.f32.mrf.mxu0
  %87 = vdwg.mxu0
  %v88 = vadd.f32 %v65, %v85
  %vm89 = vcmask 7168
  %90 = vst.msk [vmem:[#allocation3] sm:$0xff] %vm89, %v88
  // Predicated region
  $region18: #{tpu_custom_call.1} parent=0 // pred_check
    %p91 = pneg %p16
  $region19: #{tpu_custom_call.1} parent=0 // pred_check_branch
    %93 = sbr.rel (%p91) target = $region21
  $region20: #{tpu_custom_call.1} parent=0 // pred_region
    %v94 = vld [vmem:[#allocation2] sm:$0xff]
    %v95 = vmul.f32 %v94, %v94
    %vm96 = vcmask 130048
    %v97 = vsel %vm96, %v95, 0.0
    %98 = vadd.xlane.f32.xlu0 %v97
    %v99 = vpop.xlane.xlu0 %98
    %v100 = vmul.f32 %v99, 0.5
    %s101 = sld [smem:[#allocation4]]
    %v102 = vstv %s101
    %v103 = vadd.f32 %v94, %v102
    %v104 = vadd.f32 %v103, %v100
    %v105 = vld [vmem:[#allocation3] sm:$0xff]
    %107 = vrot.lane.b32.xlu0 %v105, 16
    %v108 = vpop.permute.xlu0 %107
    %v110 = vadd.f32 %v104, %v108
    %112 = vrot.lane.b32.xlu0 %v110, 112
    %v113 = vpop.permute.xlu0 %112
    %115 = vst.msk [vmem:[%s3] sm:$0xff] %vm89, %v113
  $region21: #{tpu_custom_call.1} parent=0 // pred_fallthru
    _
  // Predicated region
  $region22: #{tpu_custom_call.1} parent=0 // pred_check
    _
  $region23: #{tpu_custom_call.1} parent=0 // pred_check_branch
    %117 = sbr.rel (0) target = $region25
  $region24: #{tpu_custom_call.1} parent=0 // pred_region
    _
  $region25: #{tpu_custom_call.1} parent=0 // pred_fallthru
    _
  // Predicated region
  $region26: #{tpu_custom_call.1} parent=0 // pred_check
    _
  $region27: #{tpu_custom_call.1} parent=0 // pred_check_branch
    %119 = sbr.rel (0) target = $region29
  $region28: #{tpu_custom_call.1} parent=0 // pred_region
    _
  $region29: #{tpu_custom_call.1} parent=0 // pred_fallthru
    _

// kernel: tpu_custom_call.1
$region0: #{tpu_custom_call.1}
  #allocation0 [shape = 'u32[]', space=smem, size = 0x4, offset = 0x4, fixed_abs, tag = 'smem constant byte address 0x4 - core index']
  #allocation1 [shape = 'u32[72,128]{1,0:T(1,128)}', space=vmem, size = 0x9000, scoped, tag = 'internal scratch']
  #allocation2 [shape = 'f32[8,18]{1,0:T(8,128)}', space=vmem, size = 0x1000, scoped, tag = 'scratch operand']
  #allocation3 [shape = 'f32[8,1]{1,0:T(8,128)}', space=vmem, size = 0x1000, scoped, tag = 'scratch operand']
  #allocation4 [shape = 'f32[1]{0:T(128)S(6)}', space=smem, size = 0x200, scoped, tag = 'scoped memory for tpu_custom_call.1']
  %s0 = inlined_call_operand.<no memory space> [shape: f32[1], index: 0, kind: input, shape index: {}]
  %s1 = inlined_call_operand.vmem [shape: bf16[8,32], index: 1, kind: input, shape index: {}]
  %s2 = inlined_call_operand.vmem [shape: bf16[32,18], index: 2, kind: input, shape index: {}]
  %s3 = inlined_call_operand.vmem [shape: f32[8,1], index: 3, kind: output, shape index: {}]
  %s4 = sld [smem:[#allocation0]]
  $region30: #{tpu_custom_call.1} parent=0
    _
  %s6 = ssub.s32 1, %s4
  %s7 = scalar_select 0, %s6, %s4
  %8 = sst [smem:[#allocation4]] %s0
  // Predicated region
  $region2: #{tpu_custom_call.1} parent=0 // pred_check
    _
  $region3: #{tpu_custom_call.1} parent=0 // pred_check_branch
    %10 = sbr.rel (0) target = $region5
  $region4: #{tpu_custom_call.1} parent=0 // pred_region
    _
  $region5: #{tpu_custom_call.1} parent=0 // pred_fallthru
    _
  // Predicated region
  $region6: #{tpu_custom_call.1} parent=0 // pred_check
    _
  $region7: #{tpu_custom_call.1} parent=0 // pred_check_branch
    %12 = sbr.rel (0) target = $region9
  $region8: #{tpu_custom_call.1} parent=0 // pred_region
    _
  $region9: #{tpu_custom_call.1} parent=0 // pred_fallthru
    _
  // Predicated region
  $region10: #{tpu_custom_call.1} parent=0 // pred_check
    _
  $region11: #{tpu_custom_call.1} parent=0 // pred_check_branch
    %14 = sbr.rel (0) target = $region13
  $region12: #{tpu_custom_call.1} parent=0 // pred_region
    _
  $region13: #{tpu_custom_call.1} parent=0 // pred_fallthru
    _
  %p16 = scmp.eq.s32.totalorder 0, 0
  // Predicated region
  $region14: #{tpu_custom_call.1} parent=0 // pred_check
    %p17 = pneg %p16
  $region15: #{tpu_custom_call.1} parent=0 // pred_check_branch
    %19 = sbr.rel (%p17) target = $region17
  $region16: #{tpu_custom_call.1} parent=0 // pred_region
    %vm20 = vcmask 146432
    %21 = vst.msk [vmem:[#allocation2] sm:$0xff] %vm20, 0.0
    %vm22 = vcmask 7168
    %23 = vst.msk [vmem:[#allocation3] sm:$0xff] %vm22, 0.0
  $region17: #{tpu_custom_call.1} parent=0 // pred_fallthru
    _
  %v24 = vld [vmem:[%s1] sm:$0xf]
  %v25 = vld [vmem:[%s2] sm:$0xf]
  %v26 = vld [vmem:[%s2 + $0x4] sm:$0xf]
  %v27 = vld [vmem:[%s2 + $0x8] sm:$0xf]
  %v28 = vld [vmem:[%s2 + $0xc] sm:$0xf]
  %v29 = vld [vmem:[#allocation2] sm:$0xff]
  %v34 = vunpack.c.l.b16 %v25
  %v35 = vunpack.c.l.b16 %v26
  %v36 = vunpack.c.l.b16 %v27
  %v37 = vunpack.c.l.b16 %v28
  %v38 = vpack.c.b16 %v35, %v34
  %v39 = vpack.c.b16 %v37, %v36
  %vm42 = vcmask 261120
  %v44 = vsel %vm42, %v24, 0
  %46 = vmatpush.bf16.msra.mxu0 0
  %47 = vmatpush.bf16.msra.mxu0 0
  %48 = vmatpush.bf16.msra.mxu0 0
  %49 = vmatpush.bf16.msra.mxu0 0
  %50 = vmatpush.bf16.msra.mxu0 0
  %51 = vmatpush.bf16.msra.mxu0 0
  %52 = vmatpush.bf16.msra.mxu0 %v39
  %53 = vmatpush.bf16.msra.mxu0 %v38
  %54 = vmatmul.bf16.gmra.mxu0 %v44
  %v55 = vpop.f32.mrf.mxu0
  %v56 = vadd.f32 0.0, %v55
  %v57 = vpop.f32.mrf.mxu0
  %58 = vdwg.mxu0
  %v59 = vadd.f32 %v29, %v56
  %vm60 = vcmask 146432
  %61 = vst.msk [vmem:[#allocation2] sm:$0xff] %vm60, %v59
  %v62 = vunpack.c.l.bf16 %v24
  %v63 = vmul.f32 %v62, %v62
  %v64 = vpack.c.bf16 %v63, %v63
  %v65 = vld [vmem:[#allocation3] sm:$0xff]
  %66 = vrot.lane.b32.xlu0 %v38, 111
  %v67 = vpop.permute.xlu0 %66
  %68 = vrot.lane.b32.xlu0 %v39, 111
  %v69 = vpop.permute.xlu0 %68
  %v73 = vsel %vm42, %v64, 0
  %75 = vmatpush.bf16.msra.mxu0 0
  %76 = vmatpush.bf16.msra.mxu0 0
  %77 = vmatpush.bf16.msra.mxu0 0
  %78 = vmatpush.bf16.msra.mxu0 0
  %79 = vmatpush.bf16.msra.mxu0 0
  %80 = vmatpush.bf16.msra.mxu0 0
  %81 = vmatpush.bf16.msra.mxu0 %v69
  %82 = vmatpush.bf16.msra.mxu0 %v67
  %83 = vmatmul.bf16.gmra.mxu0 %v73
  %v84 = vpop.f32.mrf.mxu0
  %v85 = vadd.f32 0.0, %v84
  %v86 = vpop.f32.mrf.mxu0
  %87 = vdwg.mxu0
  %v88 = vadd.f32 %v65, %v85
  %vm89 = vcmask 7168
  %90 = vst.msk [vmem:[#allocation3] sm:$0xff] %vm89, %v88
  // Predicated region
  $region18: #{tpu_custom_call.1} parent=0 // pred_check
    %p91 = pneg %p16
  $region19: #{tpu_custom_call.1} parent=0 // pred_check_branch
    %93 = sbr.rel (%p91) target = $region21
  $region20: #{tpu_custom_call.1} parent=0 // pred_region
    %v94 = vld [vmem:[#allocation2] sm:$0xff]
    %v95 = vmul.f32 %v94, %v94
    %vm96 = vcmask 130048
    %v97 = vsel %vm96, %v95, 0.0
    %98 = vadd.xlane.f32.xlu0 %v97
    %v99 = vpop.xlane.xlu0 %98
    %v100 = vmul.f32 %v99, 0.5
    %s101 = sld [smem:[#allocation4]]
    %v102 = vstv %s101
    %v103 = vadd.f32 %v94, %v102
    %v104 = vadd.f32 %v103, %v100
    %v105 = vld [vmem:[#allocation3] sm:$0xff]
    %107 = vrot.lane.b32.xlu0 %v105, 16
    %v108 = vpop.permute.xlu0 %107
    %v110 = vadd.f32 %v104, %v108
    %112 = vrot.lane.b32.xlu0 %v110, 112
    %v113 = vpop.permute.xlu0 %112
    %115 = vst.msk [vmem:[%s3] sm:$0xff] %vm89, %v113
  $region21: #{tpu_custom_call.1} parent=0 // pred_fallthru
    _
  // Predicated region
  $region22: #{tpu_custom_call.1} parent=0 // pred_check
    _
  $region23: #{tpu_custom_call.1} parent=0 // pred_check_branch
    %117 = sbr.rel (0) target = $region25
  $region24: #{tpu_custom_call.1} parent=0 // pred_region
    _
  $region25: #{tpu_custom_call.1} parent=0 // pred_fallthru
    _
  // Predicated region
  $region26: #{tpu_custom_call.1} parent=0 // pred_check
    _
  $region27: #{tpu_custom_call.1} parent=0 // pred_check_branch
    %119 = sbr.rel (0) target = $region29
  $region28: #{tpu_custom_call.1} parent=0 // pred_region
    _
  $region29: #{tpu_custom_call.1} parent=0 // pred_fallthru
    _

</llo_original>
